<compile_context>
chip_gen: v5e
topology: v5e:2x2
jax: 0.10.0
libtpu: 0.0.40
codegen_flags: <defaults>
</compile_context>

<pallas_src>
import functools

import jax
import jax.numpy as jnp
from jax.experimental import pallas as pl
from jax.experimental.pallas import tpu as pltpu

_PAD_LOGIT = -1e4          # exp(-|-1e4|) == 0 in f32 -> masked lanes add 0.
_MAX_FOLD_SUBBLOCKS = 64   # bound on unrolled 128-lane sub-block adds / step.


def _round_up(x, m):
    return (x + m - 1) // m * m


def _vmem_budget_bytes():
    """~75% of this generation's physical VMEM (conservative fallback)."""
    try:
        cap = int(pltpu.get_tpu_info().vmem_capacity_bytes)
    except Exception:
        cap = 64 * 2**20          # v7x-sized fallback: safe on every generation
    return max(32 * 2**20, (cap * 3) // 4)


def _choose_tile_l(n_rows, n_cols, itemsize, vmem_budget, lane_tile_cap=None):
    """Lane tile (multiple of 128) targeting MiB-scale, budget-aware blocks."""
    l_aligned = _round_up(max(n_cols, 1), 128)
    acc_bytes = 4 * _round_up(max(n_rows, 1), 8) * 128 * 4   # 4 f32 accumulators
    # 2 inputs x 2 pipeline buffers = 4 live input blocks; keep ~2x headroom.
    per_block = max((vmem_budget - acc_bytes) // 8, 8 * 128 * itemsize)
    target = min(per_block, 4 * 2**20)
    tile_l = (target // max(n_rows * itemsize, 1)) // 128 * 128
    tile_l = int(max(128, min(tile_l, l_aligned, _MAX_FOLD_SUBBLOCKS * 128)))
    if lane_tile_cap is not None:
        tile_l = int(max(128, min(tile_l, _round_up(lane_tile_cap, 128))))
    return tile_l


def _partial_sums_kernel(x_ref, y_ref,
                         bce_out, inter_out, psum_out, ysum_out,
                         bce_acc, inter_acc, p_acc, y_acc, *,
                         n_cols, tile_l, tiles_per_chunk, needs_mask,
                         approx_recip):
    """Per-row sums of [BCE, probs*y, probs, y] over one column chunk."""
    c = pl.program_id(0)                 # parallel chunk of the column range
    j = pl.program_id(1)                 # arbitrary: column tile within chunk

    @pl.when(j == 0)
    def _init():
        bce_acc[...] = jnp.zeros_like(bce_acc)
        inter_acc[...] = jnp.zeros_like(inter_acc)
        p_acc[...] = jnp.zeros_like(p_acc)
        y_acc[...] = jnp.zeros_like(y_acc)

    x = x_ref[...].astype(jnp.float32)   # (rows, tile_l)
    y = y_ref[...].astype(jnp.float32)

    if needs_mask:
        # Ragged / out-of-range column tile: lanes >= n_cols contribute exactly
        # zero (exp(-|PAD|) == 0 and y == 0), so no special finalize is needed.
        col0 = (c * tiles_per_chunk + j) * tile_l
        lane = jax.lax.broadcasted_iota(jnp.int32, x.shape, 1)
        valid = (col0 + lane) < n_cols
        x = jnp.where(valid, x, _PAD_LOGIT)
        y = jnp.where(valid, y, 0.0)

    # Shared transcendental: e = exp(-|x|) feeds both the stable
    # BCE-with-logits log term and the stable sigmoid.
    e = jnp.exp(-jnp.abs(x))
    one_plus_e = 1.0 + e
    if approx_recip:
        inv = pl.reciprocal(one_plus_e, approx=True)   # single EUP vrcp
    else:
        inv = 1.0 / one_plus_e
    probs = jnp.where(x >= 0.0, inv, e * inv)          # sigmoid(x)
    bce = jnp.maximum(x, 0.0) - x * y + jnp.log1p(e)

    # Deferred cross-lane reduction: VPU-add the tile's 128-lane sub-blocks
    # into lane-dense (rows, 128) accumulators; one XLU reduce in finalize.
    def _fold(v):
        s = v[:, 0:128]
        for i in range(1, tile_l // 128):
            s = s + v[:, i * 128:(i + 1) * 128]
        return s

    bce_acc[...] += _fold(bce)
    inter_acc[...] += _fold(probs * y)
    p_acc[...] += _fold(probs)
    y_acc[...] += _fold(y)

    @pl.when(j == pl.num_programs(1) - 1)
    def _finalize():
        bce_out[...] = jnp.sum(bce_acc[...], axis=1, keepdims=True)[None]
        inter_out[...] = jnp.sum(inter_acc[...], axis=1, keepdims=True)[None]
        psum_out[...] = jnp.sum(p_acc[...], axis=1, keepdims=True)[None]
        ysum_out[...] = jnp.sum(y_acc[...], axis=1, keepdims=True)[None]


def _row_partial_sums(x2d, y2d, *, approx_recip=True, lane_tile_cap=None):
    """Returns per-row (bce_sum, intersection, prob_sum, mask_sum) as f32."""
    rows, cols = x2d.shape
    itemsize = max(x2d.dtype.itemsize, y2d.dtype.itemsize)
    budget = _vmem_budget_bytes()
    tile_l = _choose_tile_l(rows, cols, itemsize, budget, lane_tile_cap)

    n_col_tiles = pl.cdiv(cols, tile_l)
    # Leading "parallel" chunk axis so v7x can run both TensorCores; on 1-TC
    # chips it is just a short outer sequential loop.
    n_chunks = 2 if (n_col_tiles >= 2 and
                     (n_col_tiles % 2 == 0 or n_col_tiles >= 8)) else 1
    tiles_per_chunk = pl.cdiv(n_col_tiles, n_chunks)
    needs_mask = (n_chunks * tiles_per_chunk * tile_l) != cols

    if n_chunks * tiles_per_chunk == n_col_tiles:
        def in_index(ci, ji):
            return (0, ci * tiles_per_chunk + ji)
    else:
        last = n_col_tiles - 1

        def in_index(ci, ji):
            # Clamp the single fully out-of-range tile onto the last real
            # tile; its lanes are all masked off inside the kernel.
            return (0, jnp.minimum(ci * tiles_per_chunk + ji, last))

    kernel = functools.partial(
        _partial_sums_kernel,
        n_cols=cols, tile_l=tile_l, tiles_per_chunk=tiles_per_chunk,
        needs_mask=needs_mask, approx_recip=approx_recip)

    out_sds = jax.ShapeDtypeStruct((n_chunks, rows, 1), jnp.float32)
    out_spec = pl.BlockSpec((1, rows, 1), lambda ci, ji: (ci, 0, 0))

    outs = pl.pallas_call(
        kernel,
        out_shape=(out_sds,) * 4,
        grid_spec=pltpu.PrefetchScalarGridSpec(
            num_scalar_prefetch=0,
            grid=(n_chunks, tiles_per_chunk),
            in_specs=[pl.BlockSpec((rows, tile_l), in_index),
                      pl.BlockSpec((rows, tile_l), in_index)],
            out_specs=(out_spec,) * 4,
            scratch_shapes=[pltpu.VMEM((rows, 128), jnp.float32)
                            for _ in range(4)],
        ),
        compiler_params=pltpu.CompilerParams(
            dimension_semantics=("parallel", "arbitrary"),
            vmem_limit_bytes=budget,
        ),
    )(x2d, y2d)

    bce, inter, psum, ysum = [o.sum(axis=0)[:, 0] for o in outs]
    return bce, inter, psum, ysum


def bce_dice_loss(pred, mask, edge_pred=None, edge_mask=None,
                  weight_bce=0.5, weight_dice=0.5, edge_weight=0.2,
                  approx_recip=True, lane_tile_cap=None):
    """Pallas implementation of BCEDiceLoss.forward. Returns an f32 scalar."""
    n, ch, h, w = pred.shape
    pred2d = pred.reshape(n * ch, h * w)      # zero-copy reshape, no HBM pass
    mask2d = mask.reshape(n * ch, h * w)

    bce_rows, inter, psum, ysum = _row_partial_sums(
        pred2d, mask2d, approx_recip=approx_recip, lane_tile_cap=lane_tile_cap)

    # Tiny finalize in plain JAX (scalars / (N*C,)-vectors only).
    bce = jnp.sum(bce_rows) / float(pred2d.size)
    smooth = jnp.float32(1e-05)
    dice = 1.0 - jnp.mean((2.0 * inter + smooth) / (psum + ysum + smooth))
    loss = weight_bce * bce + weight_dice * dice

    if edge_pred is not None and edge_mask is not None:
        en, ec, eh, ew = edge_pred.shape
        ep2d = edge_pred.reshape(en * ec, eh * ew)
        em2d = edge_mask.reshape(en * ec, eh * ew)
        ebce_rows, _, _, _ = _row_partial_sums(
            ep2d, em2d, approx_recip=approx_recip, lane_tile_cap=lane_tile_cap)
        loss = loss + edge_weight * (jnp.sum(ebce_rows) / float(ep2d.size))
    return loss


def _reference(pred, mask, edge_pred=None, edge_mask=None,
               weight_bce=0.5, weight_dice=0.5, edge_weight=0.2):
    """Pure-JAX mirror of the PyTorch module, for sanity checking."""
    def bce_mean(x, y):
        x = x.astype(jnp.float32)
        y = y.astype(jnp.float32)
        return jnp.mean(jnp.maximum(x, 0.0) - x * y
                        + jnp.log1p(jnp.exp(-jnp.abs(x))))

    bce = bce_mean(pred, mask)
    smooth = 1e-05
    probs = jax.nn.sigmoid(pred.astype(jnp.float32))
    maskf = mask.astype(jnp.float32)
    inter = jnp.sum(probs * maskf, axis=(2, 3))
    union = jnp.sum(probs, axis=(2, 3)) + jnp.sum(maskf, axis=(2, 3))
    dice = 1.0 - jnp.mean((2.0 * inter + smooth) / (union + smooth))
    loss = weight_bce * bce + weight_dice * dice
    if edge_pred is not None and edge_mask is not None:
        loss = loss + edge_weight * bce_mean(edge_pred, edge_mask)
    return loss


if __name__ == "__main__":
    key = jax.random.PRNGKey(0)
    k1, k2, k3, k4, k5, k6 = jax.random.split(key, 6)

    N, C, H, W = 2, 4, 16, 16
    pred = jax.random.normal(k1, (N, C, H, W), dtype=jnp.float32)
    mask = jax.random.bernoulli(k2, 0.5, (N, C, H, W)).astype(jnp.float32)
    edge_pred = jax.random.normal(k3, (N, 1, H, W), dtype=jnp.float32)
    edge_mask = jax.random.bernoulli(k4, 0.3, (N, 1, H, W)).astype(jnp.float32)

    # 1) Default path (approx reciprocal on the EUP) -> slightly looser check.
    loss = jax.block_until_ready(bce_dice_loss(pred, mask, edge_pred, edge_mask))
    ref = jax.block_until_ready(_reference(pred, mask, edge_pred, edge_mask))
    assert jnp.allclose(loss, ref, atol=2e-3, rtol=2e-3), (loss, ref)

    # 2) Exact-reciprocal path -> tight check (with and without edge branch).
    loss_exact = jax.block_until_ready(
        bce_dice_loss(pred, mask, edge_pred, edge_mask, approx_recip=False))
    assert jnp.allclose(loss_exact, ref, atol=1e-4, rtol=1e-4), (loss_exact, ref)

    loss_ne = jax.block_until_ready(bce_dice_loss(pred, mask, approx_recip=False))
    ref_ne = jax.block_until_ready(_reference(pred, mask))
    assert jnp.allclose(loss_ne, ref_ne, atol=1e-4, rtol=1e-4), (loss_ne, ref_ne)

    # 3) Exercise the multi-tile / 2-chunk "parallel" path by capping the lane
    #    tile at 128 on a wider spatial extent (4 column tiles -> grid (2, 2)).
    pred_w = jax.random.normal(k5, (N, C, 16, 32), dtype=jnp.float32)
    mask_w = jax.random.bernoulli(k6, 0.5, (N, C, 16, 32)).astype(jnp.float32)
    loss_w = jax.block_until_ready(
        bce_dice_loss(pred_w, mask_w, approx_recip=False, lane_tile_cap=128))
    ref_w = jax.block_until_ready(_reference(pred_w, mask_w))
    assert jnp.allclose(loss_w, ref_w, atol=1e-4, rtol=1e-4), (loss_w, ref_w)

    print("KERNEL_OK")
</pallas_src>

<mosaic_0001>
module attributes {stable_mosaic.version = 11 : i64} {
  func.func @_partial_sums_kernel(%arg0: i32, %arg1: i32, %arg2: memref<8x256xf32, #tpu.memory_space<vmem>>, %arg3: memref<8x256xf32, #tpu.memory_space<vmem>>, %arg4: memref<1x8x1xf32, #tpu.memory_space<vmem>>, %arg5: memref<1x8x1xf32, #tpu.memory_space<vmem>>, %arg6: memref<1x8x1xf32, #tpu.memory_space<vmem>>, %arg7: memref<1x8x1xf32, #tpu.memory_space<vmem>>, %arg8: memref<8x128xf32, #tpu.memory_space<vmem>>, %arg9: memref<8x128xf32, #tpu.memory_space<vmem>>, %arg10: memref<8x128xf32, #tpu.memory_space<vmem>>, %arg11: memref<8x128xf32, #tpu.memory_space<vmem>>) attributes {dimension_semantics = [#tpu.dimension_semantics<parallel>, #tpu.dimension_semantics<arbitrary>], iteration_bounds = array<i64: 1, 1>, scalar_prefetch = 0 : i64, scratch_operands = 4 : i64, tpu.core_type = #tpu.core_type<tc>, window_params = [{transform_indices = @transform_0, window_bounds = array<i64: 8, 256>}, {transform_indices = @transform_1, window_bounds = array<i64: 8, 256>}, {transform_indices = @transform_2, window_bounds = array<i64: 1, 8, 1>}, {transform_indices = @transform_3, window_bounds = array<i64: 1, 8, 1>}, {transform_indices = @transform_4, window_bounds = array<i64: 1, 8, 1>}, {transform_indices = @transform_5, window_bounds = array<i64: 1, 8, 1>}]} {
    %c0_i32 = arith.constant 0 : i32
    %0 = arith.cmpi eq, %arg1, %c0_i32 : i32
    %1 = arith.extui %0 : i1 to i32
    %c0_i32_0 = arith.constant 0 : i32
    %2 = arith.cmpi ne, %1, %c0_i32_0 : i32
    scf.if %2 {
      %cst_25 = arith.constant 0.000000e+00 : f32
      %50 = vector.broadcast %cst_25 : f32 to vector<8x128xf32>
      %c0_26 = arith.constant 0 : index
      %c0_27 = arith.constant 0 : index
      %51 = vector.load %arg8[%c0_26, %c0_27] : memref<8x128xf32, #tpu.memory_space<vmem>>, vector<8x128xf32>
      tpu.vector_store %arg8[%c0_26, %c0_27], %50 {strides = array<i32>} : memref<8x128xf32, #tpu.memory_space<vmem>>, vector<8x128xf32>,
      %cst_28 = arith.constant 0.000000e+00 : f32
      %52 = vector.broadcast %cst_28 : f32 to vector<8x128xf32>
      %c0_29 = arith.constant 0 : index
      %c0_30 = arith.constant 0 : index
      %53 = vector.load %arg9[%c0_29, %c0_30] : memref<8x128xf32, #tpu.memory_space<vmem>>, vector<8x128xf32>
      tpu.vector_store %arg9[%c0_29, %c0_30], %52 {strides = array<i32>} : memref<8x128xf32, #tpu.memory_space<vmem>>, vector<8x128xf32>,
      %cst_31 = arith.constant 0.000000e+00 : f32
      %54 = vector.broadcast %cst_31 : f32 to vector<8x128xf32>
      %c0_32 = arith.constant 0 : index
      %c0_33 = arith.constant 0 : index
      %55 = vector.load %arg10[%c0_32, %c0_33] : memref<8x128xf32, #tpu.memory_space<vmem>>, vector<8x128xf32>
      tpu.vector_store %arg10[%c0_32, %c0_33], %54 {strides = array<i32>} : memref<8x128xf32, #tpu.memory_space<vmem>>, vector<8x128xf32>,
      %cst_34 = arith.constant 0.000000e+00 : f32
      %56 = vector.broadcast %cst_34 : f32 to vector<8x128xf32>
      %c0_35 = arith.constant 0 : index
      %c0_36 = arith.constant 0 : index
      %57 = vector.load %arg11[%c0_35, %c0_36] : memref<8x128xf32, #tpu.memory_space<vmem>>, vector<8x128xf32>
      tpu.vector_store %arg11[%c0_35, %c0_36], %56 {strides = array<i32>} : memref<8x128xf32, #tpu.memory_space<vmem>>, vector<8x128xf32>,
    } else {
    }
    %c0 = arith.constant 0 : index
    %c0_1 = arith.constant 0 : index
    %3 = vector.load %arg2[%c0, %c0_1] : memref<8x256xf32, #tpu.memory_space<vmem>>, vector<8x256xf32>
    %c0_2 = arith.constant 0 : index
    %c0_3 = arith.constant 0 : index
    %4 = vector.load %arg3[%c0_2, %c0_3] : memref<8x256xf32, #tpu.memory_space<vmem>>, vector<8x256xf32>
    %5 = math.absf %3 : vector<8x256xf32>
    %cst = arith.constant 0.000000e+00 : f32
    %6 = vector.broadcast %cst : f32 to vector<8x256xf32>
    %7 = arith.subf %6, %5 : vector<8x256xf32>
    %8 = math.exp %7 : vector<8x256xf32>
    %cst_4 = arith.constant 1.000000e+00 : f32
    %9 = vector.broadcast %cst_4 : f32 to vector<8x256xf32>
    %10 = arith.addf %9, %8 : vector<8x256xf32>
    %11 = tpu.reciprocal %10 {approx = true} : vector<8x256xf32> -> vector<8x256xf32>
    %cst_5 = arith.constant 0.000000e+00 : f32
    %12 = vector.broadcast %cst_5 : f32 to vector<8x256xf32>
    %13 = arith.cmpf oge, %3, %12 : vector<8x256xf32>
    %14 = arith.mulf %8, %11 : vector<8x256xf32>
    %15 = arith.select %13, %11, %14 : vector<8x256xi1>, vector<8x256xf32>
    %cst_6 = arith.constant 0.000000e+00 : f32
    %16 = vector.broadcast %cst_6 : f32 to vector<8x256xf32>
    %17 = arith.maximumf %3, %16 : vector<8x256xf32>
    %18 = arith.mulf %3, %4 : vector<8x256xf32>
    %19 = arith.subf %17, %18 : vector<8x256xf32>
    %20 = math.log1p %8 : vector<8x256xf32>
    %21 = arith.addf %19, %20 : vector<8x256xf32>
    %c0_7 = arith.constant 0 : index
    %c0_8 = arith.constant 0 : index
    %22 = vector.load %arg8[%c0_7, %c0_8] : memref<8x128xf32, #tpu.memory_space<vmem>>, vector<8x128xf32>
    %23 = vector.extract_strided_slice %21 {offsets = [0, 0], sizes = [8, 128], strides = [1, 1]} : vector<8x256xf32> to vector<8x128xf32>
    %24 = vector.extract_strided_slice %21 {offsets = [0, 128], sizes = [8, 128], strides = [1, 1]} : vector<8x256xf32> to vector<8x128xf32>
    %25 = arith.addf %23, %24 : vector<8x128xf32>
    %26 = arith.addf %22, %25 : vector<8x128xf32>
    %c0_9 = arith.constant 0 : index
    %c0_10 = arith.constant 0 : index
    %27 = vector.load %arg8[%c0_9, %c0_10] : memref<8x128xf32, #tpu.memory_space<vmem>>, vector<8x128xf32>
    tpu.vector_store %arg8[%c0_9, %c0_10], %26 {strides = array<i32>} : memref<8x128xf32, #tpu.memory_space<vmem>>, vector<8x128xf32>,
    %c0_11 = arith.constant 0 : index
    %c0_12 = arith.constant 0 : index
    %28 = vector.load %arg9[%c0_11, %c0_12] : memref<8x128xf32, #tpu.memory_space<vmem>>, vector<8x128xf32>
    %29 = arith.mulf %15, %4 : vector<8x256xf32>
    %30 = vector.extract_strided_slice %29 {offsets = [0, 0], sizes = [8, 128], strides = [1, 1]} : vector<8x256xf32> to vector<8x128xf32>
    %31 = vector.extract_strided_slice %29 {offsets = [0, 128], sizes = [8, 128], strides = [1, 1]} : vector<8x256xf32> to vector<8x128xf32>
    %32 = arith.addf %30, %31 : vector<8x128xf32>
    %33 = arith.addf %28, %32 : vector<8x128xf32>
    %c0_13 = arith.constant 0 : index
    %c0_14 = arith.constant 0 : index
    %34 = vector.load %arg9[%c0_13, %c0_14] : memref<8x128xf32, #tpu.memory_space<vmem>>, vector<8x128xf32>
    tpu.vector_store %arg9[%c0_13, %c0_14], %33 {strides = array<i32>} : memref<8x128xf32, #tpu.memory_space<vmem>>, vector<8x128xf32>,
    %c0_15 = arith.constant 0 : index
    %c0_16 = arith.constant 0 : index
    %35 = vector.load %arg10[%c0_15, %c0_16] : memref<8x128xf32, #tpu.memory_space<vmem>>, vector<8x128xf32>
    %36 = vector.extract_strided_slice %15 {offsets = [0, 0], sizes = [8, 128], strides = [1, 1]} : vector<8x256xf32> to vector<8x128xf32>
    %37 = vector.extract_strided_slice %15 {offsets = [0, 128], sizes = [8, 128], strides = [1, 1]} : vector<8x256xf32> to vector<8x128xf32>
    %38 = arith.addf %36, %37 : vector<8x128xf32>
    %39 = arith.addf %35, %38 : vector<8x128xf32>
    %c0_17 = arith.constant 0 : index
    %c0_18 = arith.constant 0 : index
    %40 = vector.load %arg10[%c0_17, %c0_18] : memref<8x128xf32, #tpu.memory_space<vmem>>, vector<8x128xf32>
    tpu.vector_store %arg10[%c0_17, %c0_18], %39 {strides = array<i32>} : memref<8x128xf32, #tpu.memory_space<vmem>>, vector<8x128xf32>,
    %c0_19 = arith.constant 0 : index
    %c0_20 = arith.constant 0 : index
    %41 = vector.load %arg11[%c0_19, %c0_20] : memref<8x128xf32, #tpu.memory_space<vmem>>, vector<8x128xf32>
    %42 = vector.extract_strided_slice %4 {offsets = [0, 0], sizes = [8, 128], strides = [1, 1]} : vector<8x256xf32> to vector<8x128xf32>
    %43 = vector.extract_strided_slice %4 {offsets = [0, 128], sizes = [8, 128], strides = [1, 1]} : vector<8x256xf32> to vector<8x128xf32>
    %44 = arith.addf %42, %43 : vector<8x128xf32>
    %45 = arith.addf %41, %44 : vector<8x128xf32>
    %c0_21 = arith.constant 0 : index
    %c0_22 = arith.constant 0 : index
    %46 = vector.load %arg11[%c0_21, %c0_22] : memref<8x128xf32, #tpu.memory_space<vmem>>, vector<8x128xf32>
    tpu.vector_store %arg11[%c0_21, %c0_22], %45 {strides = array<i32>} : memref<8x128xf32, #tpu.memory_space<vmem>>, vector<8x128xf32>,
    %c0_i32_23 = arith.constant 0 : i32
    %47 = arith.cmpi eq, %arg1, %c0_i32_23 : i32
    %48 = arith.extui %47 : i1 to i32
    %c0_i32_24 = arith.constant 0 : i32
    %49 = arith.cmpi ne, %48, %c0_i32_24 : i32
    scf.if %49 {
      %c0_25 = arith.constant 0 : index
      %c0_26 = arith.constant 0 : index
      %50 = vector.load %arg8[%c0_25, %c0_26] : memref<8x128xf32, #tpu.memory_space<vmem>>, vector<8x128xf32>
      %cst_27 = arith.constant dense<0.000000e+00> : vector<8xf32>
      %51 = vector.multi_reduction <add>, %50, %cst_27 [1] : vector<8x128xf32> to vector<8xf32>
      %52 = vector.shape_cast %51 : vector<8xf32> to vector<8x1xf32>
      %53 = vector.shape_cast %52 : vector<8x1xf32> to vector<1x8x1xf32>
      %c0_28 = arith.constant 0 : index
      %c0_29 = arith.constant 0 : index
      %c0_30 = arith.constant 0 : index
      %54 = vector.load %arg4[%c0_28, %c0_29, %c0_30] : memref<1x8x1xf32, #tpu.memory_space<vmem>>, vector<1x8x1xf32>
      tpu.vector_store %arg4[%c0_28, %c0_29, %c0_30], %53 {strides = array<i32>} : memref<1x8x1xf32, #tpu.memory_space<vmem>>, vector<1x8x1xf32>,
      %c0_31 = arith.constant 0 : index
      %c0_32 = arith.constant 0 : index
      %55 = vector.load %arg9[%c0_31, %c0_32] : memref<8x128xf32, #tpu.memory_space<vmem>>, vector<8x128xf32>
      %cst_33 = arith.constant dense<0.000000e+00> : vector<8xf32>
      %56 = vector.multi_reduction <add>, %55, %cst_33 [1] : vector<8x128xf32> to vector<8xf32>
      %57 = vector.shape_cast %56 : vector<8xf32> to vector<8x1xf32>
      %58 = vector.shape_cast %57 : vector<8x1xf32> to vector<1x8x1xf32>
      %c0_34 = arith.constant 0 : index
      %c0_35 = arith.constant 0 : index
      %c0_36 = arith.constant 0 : index
      %59 = vector.load %arg5[%c0_34, %c0_35, %c0_36] : memref<1x8x1xf32, #tpu.memory_space<vmem>>, vector<1x8x1xf32>
      tpu.vector_store %arg5[%c0_34, %c0_35, %c0_36], %58 {strides = array<i32>} : memref<1x8x1xf32, #tpu.memory_space<vmem>>, vector<1x8x1xf32>,
      %c0_37 = arith.constant 0 : index
      %c0_38 = arith.constant 0 : index
      %60 = vector.load %arg10[%c0_37, %c0_38] : memref<8x128xf32, #tpu.memory_space<vmem>>, vector<8x128xf32>
      %cst_39 = arith.constant dense<0.000000e+00> : vector<8xf32>
      %61 = vector.multi_reduction <add>, %60, %cst_39 [1] : vector<8x128xf32> to vector<8xf32>
      %62 = vector.shape_cast %61 : vector<8xf32> to vector<8x1xf32>
      %63 = vector.shape_cast %62 : vector<8x1xf32> to vector<1x8x1xf32>
      %c0_40 = arith.constant 0 : index
      %c0_41 = arith.constant 0 : index
      %c0_42 = arith.constant 0 : index
      %64 = vector.load %arg6[%c0_40, %c0_41, %c0_42] : memref<1x8x1xf32, #tpu.memory_space<vmem>>, vector<1x8x1xf32>
      tpu.vector_store %arg6[%c0_40, %c0_41, %c0_42], %63 {strides = array<i32>} : memref<1x8x1xf32, #tpu.memory_space<vmem>>, vector<1x8x1xf32>,
      %c0_43 = arith.constant 0 : index
      %c0_44 = arith.constant 0 : index
      %65 = vector.load %arg11[%c0_43, %c0_44] : memref<8x128xf32, #tpu.memory_space<vmem>>, vector<8x128xf32>
      %cst_45 = arith.constant dense<0.000000e+00> : vector<8xf32>
      %66 = vector.multi_reduction <add>, %65, %cst_45 [1] : vector<8x128xf32> to vector<8xf32>
      %67 = vector.shape_cast %66 : vector<8xf32> to vector<8x1xf32>
      %68 = vector.shape_cast %67 : vector<8x1xf32> to vector<1x8x1xf32>
      %c0_46 = arith.constant 0 : index
      %c0_47 = arith.constant 0 : index
      %c0_48 = arith.constant 0 : index
      %69 = vector.load %arg7[%c0_46, %c0_47, %c0_48] : memref<1x8x1xf32, #tpu.memory_space<vmem>>, vector<1x8x1xf32>
      tpu.vector_store %arg7[%c0_46, %c0_47, %c0_48], %68 {strides = array<i32>} : memref<1x8x1xf32, #tpu.memory_space<vmem>>, vector<1x8x1xf32>,
    } else {
    }
    return
  }
  func.func @transform_0(%arg0: i32, %arg1: i32) -> (i32, i32) {
    %c1_i32 = arith.constant 1 : i32
    %0 = arith.muli %arg0, %c1_i32 : i32
    %1 = arith.addi %0, %arg1 : i32
    %c0_i32 = arith.constant 0 : i32
    %c0_i32_0 = arith.constant 0 : i32
    return %c0_i32, %1 : i32, i32
  }
  func.func @transform_1(%arg0: i32, %arg1: i32) -> (i32, i32) {
    %c1_i32 = arith.constant 1 : i32
    %0 = arith.muli %arg0, %c1_i32 : i32
    %1 = arith.addi %0, %arg1 : i32
    %c0_i32 = arith.constant 0 : i32
    %c0_i32_0 = arith.constant 0 : i32
    return %c0_i32, %1 : i32, i32
  }
  func.func @transform_2(%arg0: i32, %arg1: i32) -> (i32, i32, i32) {
    %c0_i32 = arith.constant 0 : i32
    %c0_i32_0 = arith.constant 0 : i32
    %c0_i32_1 = arith.constant 0 : i32
    return %arg0, %c0_i32, %c0_i32_0 : i32, i32, i32
  }
  func.func @transform_3(%arg0: i32, %arg1: i32) -> (i32, i32, i32) {
    %c0_i32 = arith.constant 0 : i32
    %c0_i32_0 = arith.constant 0 : i32
    %c0_i32_1 = arith.constant 0 : i32
    return %arg0, %c0_i32, %c0_i32_0 : i32, i32, i32
  }
  func.func @transform_4(%arg0: i32, %arg1: i32) -> (i32, i32, i32) {
    %c0_i32 = arith.constant 0 : i32
    %c0_i32_0 = arith.constant 0 : i32
    %c0_i32_1 = arith.constant 0 : i32
    return %arg0, %c0_i32, %c0_i32_0 : i32, i32, i32
  }
  func.func @transform_5(%arg0: i32, %arg1: i32) -> (i32, i32, i32) {
    %c0_i32 = arith.constant 0 : i32
    %c0_i32_0 = arith.constant 0 : i32
    %c0_i32_1 = arith.constant 0 : i32
    return %arg0, %c0_i32, %c0_i32_0 : i32, i32, i32
  }
}

</mosaic_0001>

<llo_original>
// kernel: tpu_custom_call.1
$region0: #{tpu_custom_call.1}
  #allocation0 [shape = 'u32[]', space=smem, size = 0x4, offset = 0x4, fixed_abs, tag = 'smem constant byte address 0x4 - core index']
  #allocation1 [shape = 'u32[72,128]{1,0:T(1,128)}', space=vmem, size = 0x9000, scoped, tag = 'internal scratch']
  #allocation2 [shape = 'f32[8,128]{1,0:T(8,128)}', space=vmem, size = 0x1000, scoped, tag = 'scratch operand']
  #allocation3 [shape = 'f32[8,128]{1,0:T(8,128)}', space=vmem, size = 0x1000, scoped, tag = 'scratch operand']
  #allocation4 [shape = 'f32[8,128]{1,0:T(8,128)}', space=vmem, size = 0x1000, scoped, tag = 'scratch operand']
  #allocation5 [shape = 'f32[8,128]{1,0:T(8,128)}', space=vmem, size = 0x1000, scoped, tag = 'scratch operand']
  %s0 = inlined_call_operand.hbm [shape: f32[8,256], index: 0, kind: input, shape index: {}]
  %s1 = inlined_call_operand.hbm [shape: f32[8,256], index: 1, kind: input, shape index: {}]
  %s2 = inlined_call_operand.vmem [shape: f32[1,8,1], index: 2, kind: output, shape index: {0}]
  %s3 = inlined_call_operand.vmem [shape: f32[1,8,1], index: 3, kind: output, shape index: {1}]
  %s4 = inlined_call_operand.vmem [shape: f32[1,8,1], index: 4, kind: output, shape index: {2}]
  %s5 = inlined_call_operand.vmem [shape: f32[1,8,1], index: 5, kind: output, shape index: {3}]
  %6 = xla_tuple %s2, %s3, %s4, %s5
  %s7 = sld [smem:[#allocation0]]
  $region58: #{tpu_custom_call.1} parent=0
    _
  %s9 = ssub.s32 1, %s7
  %s10 = scalar_select 0, %s9, %s7
  $region1: #{tpu_custom_call.1} parent=0
    #allocation6 [shape = 'u8[8192]{0}', space=vmem, size = 0x2000, scoped, tag = 'input window, operand 0, single buffered']
    #allocation7 [shape = 's32[1]{0}', space=sflag, size = 0x4, scoped, tag = 'scoped memory for tpu_custom_call.1']
    #allocation8 [shape = 'u8[8192]{0}', space=vmem, size = 0x2000, scoped, tag = 'input window, operand 1, single buffered']
    #allocation9 [shape = 's32[1]{0}', space=sflag, size = 0x4, scoped, tag = 'scoped memory for tpu_custom_call.1']
    %11 = vsyncpa [#allocation7], 0
    %12 = vsyncpa [#allocation9], 0
    // Predicated region
    $region2: #{tpu_custom_call.1} parent=1 // pred_check
      _
    $region3: #{tpu_custom_call.1} parent=1 // pred_check_branch
      %14 = sbr.rel (0) target = $region5
    $region4: #{tpu_custom_call.1} parent=1 // pred_region
      %s15 = sadd.s32 0, 0
      %s16 = smul.u32 2, %s15
      %18 = vsyncadd [#allocation7], 0
      %s19 = smul.addr %s16, 8
      %s20 = scalar_lea.hbm %s0, %s19
      %s22 = sshll.u32 %s20, 4
      %s23 = int_to_ptr.hbm [resolvable:$true] %s22
      %s24 = sshll.u32 [#allocation6], 4
      %s25 = int_to_ptr.vmem [resolvable:$true] %s24
      %27 = dma.hbm_to_vmem [thread:$0]  %s23, 256, %s25, [#allocation7]
    $region5: #{tpu_custom_call.1} parent=1 // pred_fallthru
      _
    // Predicated region
    $region6: #{tpu_custom_call.1} parent=1 // pred_check
      _
    $region7: #{tpu_custom_call.1} parent=1 // pred_check_branch
      %29 = sbr.rel (0) target = $region9
    $region8: #{tpu_custom_call.1} parent=1 // pred_region
      %s30 = sadd.s32 0, 0
      %s31 = smul.u32 2, %s30
      %33 = vsyncadd [#allocation9], 0
      %s34 = smul.addr %s31, 8
      %s35 = scalar_lea.hbm %s1, %s34
      %s37 = sshll.u32 %s35, 4
      %s38 = int_to_ptr.hbm [resolvable:$true] %s37
      %s39 = sshll.u32 [#allocation8], 4
      %s40 = int_to_ptr.vmem [resolvable:$true] %s39
      %42 = dma.hbm_to_vmem [thread:$0]  %s38, 256, %s40, [#allocation9]
    $region9: #{tpu_custom_call.1} parent=1 // pred_fallthru
      _
    // Predicated region
    $region10: #{tpu_custom_call.1} parent=1 // pred_check
      _
    $region11: #{tpu_custom_call.1} parent=1 // pred_check_branch
      %44 = sbr.rel (0) target = $region13
    $region12: #{tpu_custom_call.1} parent=1 // pred_region
      %46 = dma.done [#allocation7], 256
    $region13: #{tpu_custom_call.1} parent=1 // pred_fallthru
      _
    // Predicated region
    $region14: #{tpu_custom_call.1} parent=1 // pred_check
      _
    $region15: #{tpu_custom_call.1} parent=1 // pred_check_branch
      %48 = sbr.rel (0) target = $region17
    $region16: #{tpu_custom_call.1} parent=1 // pred_region
      %50 = dma.done [#allocation9], 256
    $region17: #{tpu_custom_call.1} parent=1 // pred_fallthru
      _
    %s51 = sadd.s32 0, 0
    %s52 = smul.u32 2, %s51
    %s53 = sadd.s32 0, 0
    %s54 = smul.u32 2, %s53
    %p55 = scmp.eq.s32.totalorder 0, 0
    // Predicated region
    $region18: #{tpu_custom_call.1} parent=1 // pred_check
      %p56 = pneg %p55
    $region19: #{tpu_custom_call.1} parent=1 // pred_check_branch
      %58 = sbr.rel (%p56) target = $region21
    $region20: #{tpu_custom_call.1} parent=1 // pred_region
      %59 = vst [vmem:[#allocation2] sm:$0xff] 0.0
      %60 = vst [vmem:[#allocation3] sm:$0xff] 0.0
      %61 = vst [vmem:[#allocation4] sm:$0xff] 0.0
      %62 = vst [vmem:[#allocation5] sm:$0xff] 0.0
    $region21: #{tpu_custom_call.1} parent=1 // pred_fallthru
      _
    %v63 = vld [vmem:[#allocation6] sm:$0xff]
    %v64 = vld [vmem:[#allocation6 + $0x8] sm:$0xff]
    %v65 = vld [vmem:[#allocation8] sm:$0xff]
    %v66 = vld [vmem:[#allocation8 + $0x8] sm:$0xff]
    %v67 = vand.u32 2147483647, %v63
    %v68 = vand.u32 2147483647, %v64
    %v69 = vsub.f32 0.0, %v67
    %v70 = vsub.f32 0.0, %v68
    %v71 = vmul.f32 %v69, 1.442695
    %v72 = vpow.pop %v71
    %v73 = vmul.f32 %v70, 1.442695
    %v74 = vpow.pop %v73
    %v75 = vadd.f32 %v72, 1.0
    %v76 = vadd.f32 %v74, 1.0
    %v77 = vrcp.pop %v75
    %v78 = vrcp.pop %v76
    %vm79 = vcmp.ge.f32.partialorder %v63, 0.0
    %vm80 = vcmp.ge.f32.partialorder %v64, 0.0
    %v81 = vmul.f32 %v72, %v77
    %v82 = vmul.f32 %v74, %v78
    %v83 = vsel %vm79, %v77, %v81
    %v84 = vsel %vm80, %v78, %v82
    %v85 = vmax.f32 %v63, 0.0
    %v86 = vmax.f32 %v64, 0.0
    %v87 = vmul.f32 %v63, %v65
    %v88 = vmul.f32 %v64, %v66
    %v89 = vsub.f32 %v85, %v87
    %v90 = vsub.f32 %v86, %v88
    %v91 = vadd.f32 %v72, 1.0
    %v92 = vlog2.pop %v91
    %v93 = vmul.f32 %v92, 0.6931472
    %v94 = vmul.f32 -0.5, %v72
    %v95 = vadd.f32 %v94, 1.0
    %v96 = vmul.f32 %v95, %v72
    %v97 = vand.u32 2147483647, %v72
    %vm98 = vcmp.lt.f32.partialorder %v97, 0.0004427343
    %v99 = vsel %vm98, %v96, %v93
    %v100 = vadd.f32 %v74, 1.0
    %v101 = vlog2.pop %v100
    %v102 = vmul.f32 %v101, 0.6931472
    %v103 = vmul.f32 -0.5, %v74
    %v104 = vadd.f32 %v103, 1.0
    %v105 = vmul.f32 %v104, %v74
    %v106 = vand.u32 2147483647, %v74
    %vm107 = vcmp.lt.f32.partialorder %v106, 0.0004427343
    %v108 = vsel %vm107, %v105, %v102
    %v109 = vadd.f32 %v89, %v99
    %v110 = vadd.f32 %v90, %v108
    %v111 = vld [vmem:[#allocation2] sm:$0xff]
    %v112 = vadd.f32 %v109, %v110
    %v113 = vadd.f32 %v111, %v112
    %114 = vst [vmem:[#allocation2] sm:$0xff] %v113
    %v115 = vld [vmem:[#allocation3] sm:$0xff]
    %v116 = vmul.f32 %v83, %v65
    %v117 = vmul.f32 %v84, %v66
    %v118 = vadd.f32 %v116, %v117
    %v119 = vadd.f32 %v115, %v118
    %120 = vst [vmem:[#allocation3] sm:$0xff] %v119
    %v121 = vld [vmem:[#allocation4] sm:$0xff]
    %v122 = vadd.f32 %v83, %v84
    %v123 = vadd.f32 %v121, %v122
    %124 = vst [vmem:[#allocation4] sm:$0xff] %v123
    %v125 = vld [vmem:[#allocation5] sm:$0xff]
    %v126 = vadd.f32 %v65, %v66
    %v127 = vadd.f32 %v125, %v126
    %128 = vst [vmem:[#allocation5] sm:$0xff] %v127
    // Predicated region
    $region22: #{tpu_custom_call.1} parent=1 // pred_check
      %p129 = pneg %p55
    $region23: #{tpu_custom_call.1} parent=1 // pred_check_branch
      %131 = sbr.rel (%p129) target = $region25
    $region24: #{tpu_custom_call.1} parent=1 // pred_region
      %v132 = vld [vmem:[#allocation2] sm:$0xff]
      %133 = vadd.xlane.f32.xlu0 %v132
      %v134 = vpop.xlane.xlu0 %133
      %vm135 = vcmask 7168
      %136 = vst.msk [vmem:[%s2] sm:$0xff] %vm135, %v134
      %v137 = vld [vmem:[#allocation3] sm:$0xff]
      %138 = vadd.xlane.f32.xlu0 %v137
      %v139 = vpop.xlane.xlu0 %138
      %140 = vst.msk [vmem:[%s3] sm:$0xff] %vm135, %v139
      %v141 = vld [vmem:[#allocation4] sm:$0xff]
      %142 = vadd.xlane.f32.xlu0 %v141
      %v143 = vpop.xlane.xlu0 %142
      %144 = vst.msk [vmem:[%s4] sm:$0xff] %vm135, %v143
      %v145 = vld [vmem:[#allocation5] sm:$0xff]
      %146 = vadd.xlane.f32.xlu0 %v145
      %v147 = vpop.xlane.xlu0 %146
      %148 = vst.msk [vmem:[%s5] sm:$0xff] %vm135, %v147
    $region25: #{tpu_custom_call.1} parent=1 // pred_fallthru
      _
    // Predicated region
    $region26: #{tpu_custom_call.1} parent=1 // pred_check
      _
    $region27: #{tpu_custom_call.1} parent=1 // pred_check_branch
      %150 = sbr.rel (0) target = $region29
    $region28: #{tpu_custom_call.1} parent=1 // pred_region
      _
    $region29: #{tpu_custom_call.1} parent=1 // pred_fallthru
      _
    // Predicated region
    $region30: #{tpu_custom_call.1} parent=1 // pred_check
      _
    $region31: #{tpu_custom_call.1} parent=1 // pred_check_branch
      %152 = sbr.rel (0) target = $region33
    $region32: #{tpu_custom_call.1} parent=1 // pred_region
      _
    $region33: #{tpu_custom_call.1} parent=1 // pred_fallthru
      _
    // Predicated region
    $region34: #{tpu_custom_call.1} parent=1 // pred_check
      _
    $region35: #{tpu_custom_call.1} parent=1 // pred_check_branch
      %154 = sbr.rel (0) target = $region37
    $region36: #{tpu_custom_call.1} parent=1 // pred_region
      _
    $region37: #{tpu_custom_call.1} parent=1 // pred_fallthru
      _
    // Predicated region
    $region38: #{tpu_custom_call.1} parent=1 // pred_check
      _
    $region39: #{tpu_custom_call.1} parent=1 // pred_check_branch
      %156 = sbr.rel (0) target = $region41
    $region40: #{tpu_custom_call.1} parent=1 // pred_region
      _
    $region41: #{tpu_custom_call.1} parent=1 // pred_fallthru
      _
    // Predicated region
    $region42: #{tpu_custom_call.1} parent=1 // pred_check
      _
    $region43: #{tpu_custom_call.1} parent=1 // pred_check_branch
      %158 = sbr.rel (0) target = $region45
    $region44: #{tpu_custom_call.1} parent=1 // pred_region
      _
    $region45: #{tpu_custom_call.1} parent=1 // pred_fallthru
      _
    // Predicated region
    $region46: #{tpu_custom_call.1} parent=1 // pred_check
      _
    $region47: #{tpu_custom_call.1} parent=1 // pred_check_branch
      %160 = sbr.rel (0) target = $region49
    $region48: #{tpu_custom_call.1} parent=1 // pred_region
      _
    $region49: #{tpu_custom_call.1} parent=1 // pred_fallthru
      _
    // Predicated region
    $region50: #{tpu_custom_call.1} parent=1 // pred_check
      _
    $region51: #{tpu_custom_call.1} parent=1 // pred_check_branch
      %162 = sbr.rel (0) target = $region53
    $region52: #{tpu_custom_call.1} parent=1 // pred_region
      _
    $region53: #{tpu_custom_call.1} parent=1 // pred_fallthru
      _
    // Predicated region
    $region54: #{tpu_custom_call.1} parent=1 // pred_check
      _
    $region55: #{tpu_custom_call.1} parent=1 // pred_check_branch
      %164 = sbr.rel (0) target = $region57
    $region56: #{tpu_custom_call.1} parent=1 // pred_region
      _
    $region57: #{tpu_custom_call.1} parent=1 // pred_fallthru
      _
    %165 = vsyncpa [#allocation7], 1
    %166 = vsyncpa [#allocation9], 1

</llo_original>
